<compile_context>
chip_gen: v5e
topology: v5e:2x2
jax: 0.10.0
libtpu: 0.0.40
codegen_flags: <defaults>
</compile_context>

<pallas_src>
import functools

import jax
import jax.numpy as jnp
from jax.experimental import pallas as pl
from jax.experimental.pallas import tpu as pltpu

_LANE = 128
_TILE_BUDGET = 8 * 1024 * 1024      # target bytes per preds DMA buffer
_TOTAL_BUDGET = 30 * 1024 * 1024    # target bytes for all VMEM-resident state
_NEG_BIG = -1.0e30                  # vocab padding: exp()==0, never a target


def _sublane_multiple(itemsize):
    return {4: 8, 2: 16, 1: 32}.get(itemsize, 8)


def _default_core_splits():
    """2 on chips with two TensorCores (v4/v5p megacore, v7x), else 1."""
    try:
        dev = jax.devices()[0]
    except Exception:
        return 1
    n = getattr(dev, "num_cores", None)
    if isinstance(n, int) and n > 0:
        return min(2, n)
    kind = str(getattr(dev, "device_kind", "")).lower()
    if "lite" in kind or "v5e" in kind or "v6e" in kind:
        return 1
    if "v4" in kind or "v5p" in kind or "v7" in kind or "7x" in kind:
        return 2
    return 1


def _xe_loss_kernel(preds_ref, tgt_ref, out_ref, acc_ref, *nstate,
                    batch, n_valid, steps_per_core):
    """Accumulates sum over rows of log_softmax(preds)[row, target[row]]."""
    c = pl.program_id(0)                       # core split       (parallel)
    i = pl.program_id(1)                       # batch-tile step  (arbitrary)
    n = pl.program_id(2)                       # vocab-tile step  (arbitrary)
    i_last = pl.num_programs(1) - 1
    n_last = pl.num_programs(2) - 1

    tb, tn = preds_ref.shape

    # Zero the persistent per-core accumulator at the start of this core's sweep.
    @pl.when((i == 0) & (n == 0))
    def _():
        acc_ref[...] = jnp.zeros_like(acc_ref)

    x = preds_ref[...].astype(jnp.float32)     # (TB, TN); widened in-register
    t = tgt_ref[...]                           # (TB, 1) int32

    # Row validity: inside the true batch and a legal class index (guards both
    # batch padding and any out-of-range / ignore-index style targets).
    rows = ((c * steps_per_core + i) * tb
            + jax.lax.broadcasted_iota(jnp.int32, (tb, 1), 0))
    valid = (rows < batch) & (t >= 0) & (t < n_valid)

    # Gather the target logit living in this vocab chunk via compare / select /
    # lane-reduce (VPU + XLU, no MXU).  Padded lanes can never match.
    col = n * tn + jax.lax.broadcasted_iota(jnp.int32, (tb, tn), 1)
    picked = jnp.sum(jnp.where(col == t, x, 0.0), axis=-1, keepdims=True)

    if not nstate:
        # Single vocab chunk: direct numerically-stable log-softmax stats.
        m = jnp.max(x, axis=-1, keepdims=True)
        lse = m + jnp.log(jnp.sum(jnp.exp(x - m), axis=-1, keepdims=True))
        acc_ref[...] += jnp.where(valid, picked - lse, 0.0)
    else:
        # Online (flash-softmax style) running max / exp-sum across vocab chunks.
        m_ref, s_ref = nstate

        @pl.when(n == 0)
        def _():
            m_ref[...] = jnp.full(m_ref.shape, -jnp.inf, dtype=m_ref.dtype)
            s_ref[...] = jnp.zeros_like(s_ref)

        m_old = m_ref[...]
        m_new = jnp.maximum(m_old, jnp.max(x, axis=-1, keepdims=True))
        s_new = (s_ref[...] * jnp.exp(m_old - m_new)
                 + jnp.sum(jnp.exp(x - m_new), axis=-1, keepdims=True))
        m_ref[...] = m_new
        s_ref[...] = s_new

        # picked needs no rescaling -> fold it straight into the accumulator.
        acc_ref[...] += jnp.where(valid, picked, 0.0)

        @pl.when(n == n_last)
        def _():
            lse = m_ref[...] + jnp.log(s_ref[...])
            acc_ref[...] -= jnp.where(valid, lse, 0.0)

    # Epilogue: one cross-sublane reduce + one SMEM scalar store per core.
    @pl.when((i == i_last) & (n == n_last))
    def _():
        out_ref[0, 0] = jnp.sum(acc_ref[...])


def xe_loss(preds, targets, *, batch_tile=None, n_tile=None,
            num_core_splits=None):
    """Pallas implementation of XE_LOSS.forward(preds, targets)."""
    B, N = preds.shape
    elt = jnp.dtype(preds.dtype).itemsize
    sub = _sublane_multiple(elt)

    if num_core_splits is None:
        num_core_splits = _default_core_splits()
    num_core_splits = max(1, int(num_core_splits))

    # ---- vocab (lane) tiling: pad N to 128 lanes; chunk only for huge vocabs.
    n_padded = -(-N // _LANE) * _LANE
    if n_tile is None:
        if n_padded * elt * sub <= _TILE_BUDGET:
            n_tile = n_padded                                   # whole row/block
        else:
            n_tile = max(_LANE, ((_TILE_BUDGET // (sub * elt)) // _LANE) * _LANE)
    else:
        n_tile = min(n_padded, max(_LANE, (int(n_tile) // _LANE) * _LANE))
    Np = -(-N // n_tile) * n_tile
    n_steps = Np // n_tile
    online = n_steps > 1
    n_scratch = 3 if online else 1

    # ---- batch (sublane) tiling: byte-capped, rounded to the dtype's native
    # sublane multiple, never exceeding this core's (padded) share of rows.
    rows_per_core = -(-B // num_core_splits)
    per_core_rows = max(sub, -(-rows_per_core // sub) * sub)
    if batch_tile is None:
        per_row_bytes = (2 * n_tile * elt           # preds, double-buffered
                         + 2 * _LANE * 4            # targets, dbl-buf, lane-padded
                         + n_scratch * _LANE * 4)   # (TB,1) f32 scratch, lane-padded
        bt = _TOTAL_BUDGET // per_row_bytes
        batch_tile = int(min(max(sub, (bt // sub) * sub), per_core_rows))
    else:
        batch_tile = int(max(sub, -(-int(batch_tile) // sub) * sub))

    chunk = batch_tile * num_core_splits
    Bp = -(-B // chunk) * chunk
    steps_per_core = Bp // chunk

    # ---- pad inputs.  Padded rows are masked; padded vocab lanes get a large
    # negative value so they vanish from the LSE and never match a target.
    if Bp != B or Np != N:
        preds = jnp.pad(preds, ((0, Bp - B), (0, Np - N)),
                        constant_values=_NEG_BIG)
    targets = targets.astype(jnp.int32)
    if Bp != B:
        targets = jnp.pad(targets, (0, Bp - B))
    targets_2d = targets.reshape(Bp, 1)

    kernel = functools.partial(_xe_loss_kernel, batch=B, n_valid=N,
                               steps_per_core=steps_per_core)

    scratch_shapes = [pltpu.VMEM((batch_tile, 1), jnp.float32)]      # acc
    if online:
        scratch_shapes += [pltpu.VMEM((batch_tile, 1), jnp.float32),  # run. max
                           pltpu.VMEM((batch_tile, 1), jnp.float32)]  # run. sum

    # VMEM limit derived from what is actually resident (lane padding included).
    vmem_est = (2 * batch_tile * n_tile * elt
                + 2 * batch_tile * _LANE * 4
                + n_scratch * batch_tile * _LANE * 4)
    vmem_limit = int(min(56 * 1024 * 1024,
                         max(24 * 1024 * 1024, vmem_est + 8 * 1024 * 1024)))

    partials = pl.pallas_call(
        kernel,
        out_shape=jax.ShapeDtypeStruct((num_core_splits, 1), jnp.float32),
        grid=(num_core_splits, steps_per_core, n_steps),
        in_specs=[
            # preds tile: lane axis = item/class, kept at its natural dtype
            # (bf16 inputs are DMA'd as bf16 and widened in-register).
            pl.BlockSpec((batch_tile, n_tile),
                         lambda c, i, n: (c * steps_per_core + i, n)),
            # targets tile (block index constant across n -> not re-fetched).
            pl.BlockSpec((batch_tile, 1),
                         lambda c, i, n: (c * steps_per_core + i, 0)),
        ],
        # One scalar partial per core, resident in SMEM across the reduction.
        out_specs=pl.BlockSpec((1, 1), lambda c, i, n: (c, 0),
                               memory_space=pltpu.SMEM),
        scratch_shapes=scratch_shapes,
        compiler_params=pltpu.CompilerParams(
            dimension_semantics=("parallel", "arbitrary", "arbitrary"),
            vmem_limit_bytes=vmem_limit,
        ),
        cost_estimate=pl.CostEstimate(
            flops=6 * B * N,
            transcendentals=B * N,
            bytes_accessed=Bp * Np * elt + Bp * 4 + 4 * num_core_splits,
        ),
    )(preds, targets_2d)

    # loss = -mean(log p(target)) = -(sum of per-core partials) / B
    return -jnp.sum(partials) / B


def xe_loss_reference(preds, targets, item_num):
    """Pure-JAX reference matching the torch module semantics."""
    onehot = jax.nn.one_hot(targets, item_num, dtype=jnp.float32)
    logp = jax.nn.log_softmax(preds.astype(jnp.float32), axis=1)
    per_row = jnp.sum(logp * onehot, axis=-1)
    return -jnp.mean(per_row)


if __name__ == "__main__":
    key = jax.random.PRNGKey(0)

    # Case 1: module-sized small shapes -> single-vocab-chunk fast path.
    item_num, batch = 128, 8
    k1, k2, key = jax.random.split(key, 3)
    preds = jax.random.normal(k1, (batch, item_num), dtype=jnp.float32)
    targets = jax.random.randint(k2, (batch,), 0, item_num, dtype=jnp.int32)
    loss = jax.block_until_ready(xe_loss(preds, targets))
    ref = xe_loss_reference(preds, targets, item_num)
    assert jnp.allclose(loss, ref, rtol=1e-5, atol=1e-5), (loss, ref)

    # Case 2: force the chunked-vocab online-LSE path, 2-way core split and
    # ragged batch padding (still small shapes).
    item_num, batch = 384, 10
    k1, k2, key = jax.random.split(key, 3)
    preds = jax.random.normal(k1, (batch, item_num), dtype=jnp.float32)
    targets = jax.random.randint(k2, (batch,), 0, item_num, dtype=jnp.int32)
    loss = jax.block_until_ready(
        xe_loss(preds, targets, batch_tile=8, n_tile=128, num_core_splits=2))
    ref = xe_loss_reference(preds, targets, item_num)
    assert jnp.allclose(loss, ref, rtol=1e-5, atol=1e-5), (loss, ref)

    print("KERNEL_OK")
</pallas_src>

<mosaic_0001>
module attributes {stable_mosaic.version = 11 : i64} {
  func.func @_xe_loss_kernel(%arg0: i32, %arg1: i32, %arg2: i32, %arg3: memref<8x128xf32, #tpu.memory_space<vmem>>, %arg4: memref<8x1xi32, #tpu.memory_space<vmem>>, %arg5: memref<1x1xf32, #tpu.memory_space<smem>>, %arg6: memref<8x1xf32, #tpu.memory_space<vmem>>) attributes {dimension_semantics = [#tpu.dimension_semantics<parallel>, #tpu.dimension_semantics<arbitrary>, #tpu.dimension_semantics<arbitrary>], iteration_bounds = array<i64: 1, 1, 1>, scalar_prefetch = 0 : i64, scratch_operands = 1 : i64, tpu.core_type = #tpu.core_type<tc>, window_params = [{transform_indices = @transform_0, window_bounds = array<i64: 8, 128>}, {transform_indices = @transform_1, window_bounds = array<i64: 8, 1>}, {transform_indices = @transform_2, window_bounds = array<i64: 1, 1>}]} {
    %c0_i32 = arith.constant 0 : i32
    %0 = arith.cmpi eq, %arg1, %c0_i32 : i32
    %c0_i32_0 = arith.constant 0 : i32
    %1 = arith.cmpi eq, %arg2, %c0_i32_0 : i32
    %2 = arith.andi %0, %1 : i1
    %3 = arith.extui %2 : i1 to i32
    %c0_i32_1 = arith.constant 0 : i32
    %4 = arith.cmpi ne, %3, %c0_i32_1 : i32
    scf.if %4 {
      %cst_19 = arith.constant 0.000000e+00 : f32
      %51 = vector.broadcast %cst_19 : f32 to vector<8x1xf32>
      %c0_20 = arith.constant 0 : index
      %c0_21 = arith.constant 0 : index
      %52 = vector.load %arg6[%c0_20, %c0_21] : memref<8x1xf32, #tpu.memory_space<vmem>>, vector<8x1xf32>
      tpu.vector_store %arg6[%c0_20, %c0_21], %51 {strides = array<i32>} : memref<8x1xf32, #tpu.memory_space<vmem>>, vector<8x1xf32>,
    } else {
    }
    %c0 = arith.constant 0 : index
    %c0_2 = arith.constant 0 : index
    %5 = vector.load %arg3[%c0, %c0_2] : memref<8x128xf32, #tpu.memory_space<vmem>>, vector<8x128xf32>
    %c0_3 = arith.constant 0 : index
    %c0_4 = arith.constant 0 : index
    %6 = vector.load %arg4[%c0_3, %c0_4] : memref<8x1xi32, #tpu.memory_space<vmem>>, vector<8x1xi32>
    %c1_i32 = arith.constant 1 : i32
    %7 = arith.muli %arg0, %c1_i32 : i32
    %8 = arith.addi %7, %arg1 : i32
    %c8_i32 = arith.constant 8 : i32
    %9 = arith.muli %8, %c8_i32 : i32
    %10 = tpu.iota {dimensions = array<i32: 0>} : vector<8x1xi32>
    %11 = vector.broadcast %9 : i32 to vector<8x1xi32>
    %12 = arith.addi %11, %10 : vector<8x1xi32>
    %c8_i32_5 = arith.constant 8 : i32
    %13 = vector.broadcast %c8_i32_5 : i32 to vector<8x1xi32>
    %14 = arith.cmpi slt, %12, %13 : vector<8x1xi32>
    %c0_i32_6 = arith.constant 0 : i32
    %15 = vector.broadcast %c0_i32_6 : i32 to vector<8x1xi32>
    %16 = arith.cmpi sge, %6, %15 : vector<8x1xi32>
    %17 = arith.andi %14, %16 : vector<8x1xi1>
    %c128_i32 = arith.constant 128 : i32
    %18 = vector.broadcast %c128_i32 : i32 to vector<8x1xi32>
    %19 = arith.cmpi slt, %6, %18 : vector<8x1xi32>
    %20 = arith.andi %17, %19 : vector<8x1xi1>
    %c128_i32_7 = arith.constant 128 : i32
    %21 = arith.muli %arg2, %c128_i32_7 : i32
    %22 = tpu.iota {dimensions = array<i32: 1>} : vector<8x128xi32>
    %23 = vector.broadcast %21 : i32 to vector<8x128xi32>
    %24 = arith.addi %23, %22 : vector<8x128xi32>
    %25 = vector.broadcast %6 : vector<8x1xi32> to vector<8x128xi32>
    %26 = arith.cmpi eq, %24, %25 : vector<8x128xi32>
    %cst = arith.constant 0.000000e+00 : f32
    %27 = vector.broadcast %cst : f32 to vector<8x128xf32>
    %28 = arith.select %26, %5, %27 : vector<8x128xi1>, vector<8x128xf32>
    %cst_8 = arith.constant dense<0.000000e+00> : vector<8xf32>
    %29 = vector.multi_reduction <add>, %28, %cst_8 [1] : vector<8x128xf32> to vector<8xf32>
    %30 = vector.shape_cast %29 : vector<8xf32> to vector<8x1xf32>
    %cst_9 = arith.constant dense<0xFF800000> : vector<8xf32>
    %31 = vector.multi_reduction <maximumf>, %5, %cst_9 [1] : vector<8x128xf32> to vector<8xf32>
    %32 = vector.shape_cast %31 : vector<8xf32> to vector<8x1xf32>
    %33 = vector.broadcast %32 : vector<8x1xf32> to vector<8x128xf32>
    %34 = arith.subf %5, %33 : vector<8x128xf32>
    %35 = math.exp %34 : vector<8x128xf32>
    %cst_10 = arith.constant dense<0.000000e+00> : vector<8xf32>
    %36 = vector.multi_reduction <add>, %35, %cst_10 [1] : vector<8x128xf32> to vector<8xf32>
    %37 = vector.shape_cast %36 : vector<8xf32> to vector<8x1xf32>
    %38 = math.log %37 : vector<8x1xf32>
    %39 = arith.addf %32, %38 : vector<8x1xf32>
    %c0_11 = arith.constant 0 : index
    %c0_12 = arith.constant 0 : index
    %40 = vector.load %arg6[%c0_11, %c0_12] : memref<8x1xf32, #tpu.memory_space<vmem>>, vector<8x1xf32>
    %41 = arith.subf %30, %39 : vector<8x1xf32>
    %cst_13 = arith.constant 0.000000e+00 : f32
    %42 = vector.broadcast %cst_13 : f32 to vector<8x1xf32>
    %43 = arith.select %20, %41, %42 : vector<8x1xi1>, vector<8x1xf32>
    %44 = arith.addf %40, %43 : vector<8x1xf32>
    %c0_14 = arith.constant 0 : index
    %c0_15 = arith.constant 0 : index
    %45 = vector.load %arg6[%c0_14, %c0_15] : memref<8x1xf32, #tpu.memory_space<vmem>>, vector<8x1xf32>
    tpu.vector_store %arg6[%c0_14, %c0_15], %44 {strides = array<i32>} : memref<8x1xf32, #tpu.memory_space<vmem>>, vector<8x1xf32>,
    %c0_i32_16 = arith.constant 0 : i32
    %46 = arith.cmpi eq, %arg1, %c0_i32_16 : i32
    %c0_i32_17 = arith.constant 0 : i32
    %47 = arith.cmpi eq, %arg2, %c0_i32_17 : i32
    %48 = arith.andi %46, %47 : i1
    %49 = arith.extui %48 : i1 to i32
    %c0_i32_18 = arith.constant 0 : i32
    %50 = arith.cmpi ne, %49, %c0_i32_18 : i32
    scf.if %50 {
      %c0_19 = arith.constant 0 : index
      %c0_20 = arith.constant 0 : index
      %51 = vector.load %arg6[%c0_19, %c0_20] : memref<8x1xf32, #tpu.memory_space<vmem>>, vector<8x1xf32>
      %52 = vector.shape_cast %51 : vector<8x1xf32> to vector<1x8x1xf32>
      %cst_21 = arith.constant dense<0.000000e+00> : vector<1xf32>
      %53 = vector.multi_reduction <add>, %52, %cst_21 [1, 2] : vector<1x8x1xf32> to vector<1xf32>
      %54 = vector.shape_cast %53 : vector<1xf32> to vector<1x1x1xf32>
      %55 = vector.extract %54[0, 0, 0] : f32 from vector<1x1x1xf32>
      %c0_22 = arith.constant 0 : index
      %c0_23 = arith.constant 0 : index
      %56 = memref.load %arg5[%c0_22, %c0_23] : memref<1x1xf32, #tpu.memory_space<smem>>
      memref.store %55, %arg5[%c0_22, %c0_23] : memref<1x1xf32, #tpu.memory_space<smem>>
    } else {
    }
    return
  }
  func.func @transform_0(%arg0: i32, %arg1: i32, %arg2: i32) -> (i32, i32) {
    %c1_i32 = arith.constant 1 : i32
    %0 = arith.muli %arg0, %c1_i32 : i32
    %1 = arith.addi %0, %arg1 : i32
    %c0_i32 = arith.constant 0 : i32
    return %1, %arg2 : i32, i32
  }
  func.func @transform_1(%arg0: i32, %arg1: i32, %arg2: i32) -> (i32, i32) {
    %c1_i32 = arith.constant 1 : i32
    %0 = arith.muli %arg0, %c1_i32 : i32
    %1 = arith.addi %0, %arg1 : i32
    %c0_i32 = arith.constant 0 : i32
    %c0_i32_0 = arith.constant 0 : i32
    return %1, %c0_i32 : i32, i32
  }
  func.func @transform_2(%arg0: i32, %arg1: i32, %arg2: i32) -> (i32, i32) {
    %c0_i32 = arith.constant 0 : i32
    %c0_i32_0 = arith.constant 0 : i32
    return %arg0, %c0_i32 : i32, i32
  }
}

</mosaic_0001>

<llo_original>
// kernel: tpu_custom_call.1
$region0: #{tpu_custom_call.1}
  #allocation0 [shape = 'u32[]', space=smem, size = 0x4, offset = 0x4, fixed_abs, tag = 'smem constant byte address 0x4 - core index']
  #allocation1 [shape = 'u32[72,128]{1,0:T(1,128)}', space=vmem, size = 0x9000, scoped, tag = 'internal scratch']
  #allocation2 [shape = 'f32[8,1]{1,0:T(8,128)}', space=vmem, size = 0x1000, scoped, tag = 'scratch operand']
  %s0 = inlined_call_operand.vmem [shape: f32[8,128], index: 0, kind: input, shape index: {}]
  %s1 = inlined_call_operand.vmem [shape: s32[8,1], index: 1, kind: input, shape index: {}]
  %s2 = inlined_call_operand.hbm [shape: f32[1,1], index: 2, kind: output, shape index: {}]
  %s3 = sld [smem:[#allocation0]]
  $region26: #{tpu_custom_call.1} parent=0
    _
  %s5 = ssub.s32 1, %s3
  %s6 = scalar_select 0, %s5, %s3
  $region1: #{tpu_custom_call.1} parent=0
    #allocation3 [shape = 'u8[512]{0}', space=smem, size = 0x200, scoped, tag = 'output window, operand 0, single buffered']
    #allocation4 [shape = 's32[1]{0}', space=sflag, size = 0x4, scoped, tag = 'scoped memory for tpu_custom_call.1']
    %7 = vsyncpa [#allocation4], 0
    // Predicated region
    $region2: #{tpu_custom_call.1} parent=1 // pred_check
      _
    $region3: #{tpu_custom_call.1} parent=1 // pred_check_branch
      %9 = sbr.rel (0) target = $region5
    $region4: #{tpu_custom_call.1} parent=1 // pred_region
      %s10 = sadd.s32 0, 0
      %p11 = scmp.lt.s32.totalorder %s10, 0
      %s12 = scalar_select %p11, %s10, 0
      %s13 = smul.addr %s12, 8
      %s14 = scalar_lea.vmem %s0, %s13
      %s15 = sadd.s32 0, 0
    $region5: #{tpu_custom_call.1} parent=1 // pred_fallthru
      _
    // Predicated region
    $region6: #{tpu_custom_call.1} parent=1 // pred_check
      _
    $region7: #{tpu_custom_call.1} parent=1 // pred_check_branch
      %17 = sbr.rel (0) target = $region9
    $region8: #{tpu_custom_call.1} parent=1 // pred_region
      %s18 = sadd.s32 0, 0
      %p19 = scmp.lt.s32.totalorder %s18, 0
      %s20 = scalar_select %p19, %s18, 0
      %s21 = smul.addr %s20, 8
      %s22 = scalar_lea.vmem %s1, %s21
      %s23 = sadd.s32 0, 0
    $region9: #{tpu_custom_call.1} parent=1 // pred_fallthru
      _
    %s24 = sadd.s32 0, 0
    %p25 = scmp.lt.s32.totalorder %s24, 0
    %s26 = scalar_select %p25, %s24, 0
    %s27 = smul.addr %s26, 8
    %s28 = scalar_lea.vmem %s0, %s27
    %s29 = sadd.s32 0, 0
    %p30 = scmp.lt.s32.totalorder %s29, 0
    %s31 = scalar_select %p30, %s29, 0
    %s32 = smul.addr %s31, 8
    %s33 = scalar_lea.vmem %s1, %s32
    %s34 = sadd.s32 0, 0
    %p35 = scmp.lt.s32.totalorder %s34, 0
    %s36 = scalar_select %p35, %s34, 0
    %s37 = smul.addr %s36, 8
    %s38 = scalar_lea.vmem %s0, %s37
    %s39 = sadd.s32 0, 0
    %s40 = sadd.s32 0, 0
    %p41 = scmp.lt.s32.totalorder %s40, 0
    %s42 = scalar_select %p41, %s40, 0
    %s43 = smul.addr %s42, 8
    %s44 = scalar_lea.vmem %s1, %s43
    %s45 = sadd.s32 0, 0
    %p46 = scmp.eq.s32.totalorder 0, 0
    %p47 = scmp.eq.s32.totalorder 0, 0
    %p48 = pnand %p46, %p47
    %p49 = pneg %p48
    // Predicated region
    $region10: #{tpu_custom_call.1} parent=1 // pred_check
      _
    $region11: #{tpu_custom_call.1} parent=1 // pred_check_branch
      %51 = sbr.rel (%p48) target = $region13
    $region12: #{tpu_custom_call.1} parent=1 // pred_region
      %vm52 = vcmask 7168
      %53 = vst.msk [vmem:[#allocation2] sm:$0xff] %vm52, 0.0
    $region13: #{tpu_custom_call.1} parent=1 // pred_fallthru
      _
    %v54 = vld [vmem:[%s38] sm:$0xff]
    %v55 = vld [vmem:[%s44] sm:$0xff]
    %s56 = sadd.s32 0, 0
    %s57 = smul.u32 %s56, 8
    %v58 = vlaneseq
    %v59 = vshrl.u32 %v58, 7
    %v60 = vstv %s57
    %v61 = vadd.s32 %v60, %v59
    %vm62 = vcmp.lt.s32.totalorder %v61, 8
    %vm63 = vcmp.ge.s32.totalorder %v55, 0
    %vm64 = vmand %vm62, %vm63
    %vm65 = vcmp.lt.s32.totalorder %v55, 128
    %vm66 = vmand %vm64, %vm65
    %s67 = smul.u32 0, 128
    %v68 = vlaneseq
    %v69 = vand.u32 %v68, 127
    %v70 = vstv %s67
    %v71 = vadd.s32 %v70, %v69
    %72 = vset.pattern.permute.xlu0 0
    %73 = vperm.xlu0 %72, %v55
    %v74 = vpop.permute.xlu0 %73
    %vm75 = vcmp.eq.s32.totalorder %v71, %v74
    %v76 = vsel %vm75, %v54, 0.0
    %77 = vadd.xlane.f32.xlu0 %v76
    %v78 = vpop.xlane.xlu0 %77
    %79 = vmax.xlane.f32.xlu0 %v54
    %v80 = vpop.xlane.xlu0 %79
    %v81 = vsub.f32 %v54, %v80
    %v82 = vmul.f32 %v81, 1.442695
    %v83 = vpow.pop %v82
    %84 = vadd.xlane.f32.xlu0 %v83
    %v85 = vpop.xlane.xlu0 %84
    %v86 = vlog2.pop %v85
    %v87 = vmul.f32 %v86, 0.6931472
    %v88 = vadd.f32 %v80, %v87
    %v89 = vld [vmem:[#allocation2] sm:$0xff]
    %v90 = vsub.f32 %v78, %v88
    %v91 = vsel %vm66, %v90, 0.0
    %v92 = vadd.f32 %v89, %v91
    %vm93 = vcmask 7168
    %94 = vst.msk [vmem:[#allocation2] sm:$0xff] %vm93, %v92
    // Predicated region
    $region14: #{tpu_custom_call.1} parent=1 // pred_check
      _
    $region15: #{tpu_custom_call.1} parent=1 // pred_check_branch
      %96 = sbr.rel (%p48) target = $region17
    $region16: #{tpu_custom_call.1} parent=1 // pred_region
      %v97 = vld [vmem:[#allocation2] sm:$0xff]
      %v98 = vsel %vm93, %v97, 0.0
      %99 = vadd.xlane.f32.xlu0 %v98
      %v100 = vpop.xlane.xlu0 %99
      %v101 = vrot.slane %v100, 4
      %v102 = vadd.f32 %v100, %v101
      %v103 = vrot.slane %v102, 2
      %v104 = vadd.f32 %v102, %v103
      %v105 = vrot.slane %v104, 1
      %v106 = vadd.f32 %v104, %v105
      %s107 = vtos %v106
      %s108 = scalar_lea.smem [#allocation3], 0
      %109 = sst [smem:[%s108]] %s107
    $region17: #{tpu_custom_call.1} parent=1 // pred_fallthru
      _
    // Predicated region
    $region18: #{tpu_custom_call.1} parent=1 // pred_check
      _
    $region19: #{tpu_custom_call.1} parent=1 // pred_check_branch
      %111 = sbr.rel (0) target = $region21
    $region20: #{tpu_custom_call.1} parent=1 // pred_region
      %113 = vsyncadd [#allocation4], 0
      %s115 = sshll.u32 %s2, 4
      %s116 = int_to_ptr.hbm [resolvable:$true] %s115
      %118 = dma.smem_to_hbm [#allocation3], 16, %s116, [#allocation4]
    $region21: #{tpu_custom_call.1} parent=1 // pred_fallthru
      _
    // Predicated region
    $region22: #{tpu_custom_call.1} parent=1 // pred_check
      _
    $region23: #{tpu_custom_call.1} parent=1 // pred_check_branch
      %120 = sbr.rel (0) target = $region25
    $region24: #{tpu_custom_call.1} parent=1 // pred_region
      %122 = dma.done [#allocation4], 16
    $region25: #{tpu_custom_call.1} parent=1 // pred_fallthru
      _
    %123 = sfence
    %124 = vsyncpa [#allocation4], 1

</llo_original>
